<compile_context>
chip_gen: v7x
topology: tpu7x:2x2x1
jax: 0.10.0
libtpu: 0.0.40
codegen_flags: <defaults>
</compile_context>

<pallas_src>
import functools

import jax
import jax.numpy as jnp
from jax.experimental import pallas as pl
from jax.experimental.pallas import tpu as pltpu


# -----------------------------------------------------------------------------
# Pallas kernel: fused (1x1 conv as matmul) + BN-folded bias + SiLU
# -----------------------------------------------------------------------------
def _conv1x1_bn_silu_kernel(a_ref, w_ref, b_ref, o_ref):
    # a_ref: (tm, K)   space-to-depth feature rows (K = 4*c1)
    # w_ref: (K, C2)   BN-folded conv weight
    # b_ref: (1, C2)   BN-folded bias
    # o_ref: (tm, C2)
    z = jnp.dot(a_ref[...], w_ref[...], preferred_element_type=jnp.float32)
    z = z + b_ref[...]
    # SiLU: z * sigmoid(z)  (sigmoid -> EUP, mul -> VPU)
    o_ref[...] = (z * jax.nn.sigmoid(z)).astype(o_ref.dtype)


def _fused_pointwise_conv(a, w_mat, bias, out_dtype):
    """out = silu(a @ w_mat + bias), tiled over rows of `a`."""
    M, K = a.shape
    C2 = w_mat.shape[1]

    # Tile the (large) M axis; K and C2 are small for a 1x1 conv so they stay
    # as full blocks.  512-row f32 tiles are a few hundred KiB per buffer,
    # comfortably inside VMEM on v5e/v6e/v7x while amortizing per-step overhead.
    if M > 512:
        tm = 512
    else:
        tm = max(8, ((M + 7) // 8) * 8)
    M_pad = ((M + tm - 1) // tm) * tm
    if M_pad != M:
        a = jnp.pad(a, ((0, M_pad - M), (0, 0)))

    bias2 = bias.reshape(1, C2)

    out = pl.pallas_call(
        _conv1x1_bn_silu_kernel,
        out_shape=jax.ShapeDtypeStruct((M_pad, C2), out_dtype),
        grid=(M_pad // tm,),
        in_specs=[
            pl.BlockSpec((tm, K), lambda i: (i, 0)),
            pl.BlockSpec((K, C2), lambda i: (0, 0)),
            pl.BlockSpec((1, C2), lambda i: (0, 0)),
        ],
        out_specs=pl.BlockSpec((tm, C2), lambda i: (i, 0)),
        compiler_params=pltpu.CompilerParams(
            dimension_semantics=("parallel",),
        ),
    )(a, w_mat, bias2)

    return out[:M]


# -----------------------------------------------------------------------------
# Focus forward: space-to-depth (wrapper) + fused conv/BN/SiLU (Pallas)
# -----------------------------------------------------------------------------
def focus_forward(x, weight, gamma, beta, running_mean, running_var, eps=1e-5):
    """x: (N, C1, H, W) NCHW.  weight: (C2, 4*C1) 1x1 conv weight (PyTorch layout)."""
    N, C, H, W = x.shape
    assert H % 2 == 0 and W % 2 == 0, "Focus requires even H and W"
    Ho, Wo = H // 2, W // 2
    C2 = weight.shape[0]
    K = 4 * C
    assert weight.shape[1] == K

    # Space-to-depth with the exact torch.cat channel ordering:
    #   [ (h%2=0,w%2=0), (h%2=1,w%2=0), (h%2=0,w%2=1), (h%2=1,w%2=1) ] x C
    # i.e. concat channel index = wp*2C + hp*C + c.
    xr = x.reshape(N, C, Ho, 2, Wo, 2)              # (n, c, ho, hp, wo, wp)
    xr = jnp.transpose(xr, (0, 2, 4, 5, 3, 1))      # (n, ho, wo, wp, hp, c)
    a = xr.reshape(N * Ho * Wo, K)                  # lane-dense feature matrix

    # Fold inference-mode BatchNorm into the conv weight / bias.
    scale = gamma / jnp.sqrt(running_var + eps)     # (C2,)
    w_mat = (weight * scale[:, None]).T             # (K, C2)
    b_vec = beta - running_mean * scale             # (C2,)

    out2 = _fused_pointwise_conv(a, w_mat, b_vec, x.dtype)     # (M, C2)
    out = out2.reshape(N, Ho, Wo, C2).transpose(0, 3, 1, 2)    # back to NCHW
    return out


class Focus:
    """JAX/Pallas mirror of the PyTorch Focus module (inference mode)."""

    def __init__(self, c1, c2, k=1, s=1, p=None, g=1, act=True, *, key=None):
        assert k == 1 and s == 1 and g == 1 and act is True, (
            "only the Focus defaults (1x1, stride 1, ungrouped, SiLU) are implemented"
        )
        if key is None:
            key = jax.random.PRNGKey(0)
        fan_in = 4 * c1
        bound = 1.0 / (fan_in ** 0.5)
        # Conv2d default init (Kaiming-uniform-like); BN params at PyTorch defaults.
        self.weight = jax.random.uniform(
            key, (c2, fan_in), dtype=jnp.float32, minval=-bound, maxval=bound
        )
        self.gamma = jnp.ones((c2,), jnp.float32)
        self.beta = jnp.zeros((c2,), jnp.float32)
        self.running_mean = jnp.zeros((c2,), jnp.float32)
        self.running_var = jnp.ones((c2,), jnp.float32)
        self.eps = 1e-5

    def __call__(self, x):
        return focus_forward(
            x, self.weight, self.gamma, self.beta,
            self.running_mean, self.running_var, self.eps,
        )


# -----------------------------------------------------------------------------
# Self-test
# -----------------------------------------------------------------------------
if __name__ == "__main__":
    key = jax.random.PRNGKey(0)
    kx, kw = jax.random.split(key)

    N, C1, H, W = 2, 4, 16, 16
    C2 = 32
    x = jax.random.normal(kx, (N, C1, H, W), dtype=jnp.float32)

    mod = Focus(C1, C2, key=kw)
    out = jax.block_until_ready(mod(x))

    # Pure-JAX reference mirroring the PyTorch forward.
    focus_in = jnp.concatenate(
        [x[..., ::2, ::2], x[..., 1::2, ::2], x[..., ::2, 1::2], x[..., 1::2, 1::2]],
        axis=1,
    )
    ref = jnp.einsum(
        "nkhw,ok->nohw", focus_in, mod.weight,
        precision=jax.lax.Precision.HIGHEST,
    )
    scale = mod.gamma / jnp.sqrt(mod.running_var + mod.eps)
    shift = mod.beta - mod.running_mean * scale
    ref = ref * scale[None, :, None, None] + shift[None, :, None, None]
    ref = ref * jax.nn.sigmoid(ref)

    assert out.shape == ref.shape and out.dtype == ref.dtype
    assert jnp.allclose(out, ref, atol=1e-2, rtol=1e-2), (
        float(jnp.max(jnp.abs(out - ref)))
    )

    print("KERNEL_OK")
</pallas_src>

<mosaic_0001>
module attributes {stable_mosaic.version = 11 : i64} {
  func.func @_conv1x1_bn_silu_kernel(%arg0: i32, %arg1: memref<128x16xf32, #tpu.memory_space<vmem>>, %arg2: memref<16x32xf32, #tpu.memory_space<vmem>>, %arg3: memref<1x32xf32, #tpu.memory_space<vmem>>, %arg4: memref<128x32xf32, #tpu.memory_space<vmem>>) attributes {dimension_semantics = [#tpu.dimension_semantics<parallel>], iteration_bounds = array<i64: 1>, scalar_prefetch = 0 : i64, scratch_operands = 0 : i64, tpu.core_type = #tpu.core_type<tc>, window_params = [{transform_indices = @transform_0, window_bounds = array<i64: 128, 16>}, {pipeline_mode = #tpu.pipeline_mode<synchronous>, transform_indices = @transform_1, window_bounds = array<i64: 16, 32>}, {pipeline_mode = #tpu.pipeline_mode<synchronous>, transform_indices = @transform_2, window_bounds = array<i64: 1, 32>}, {transform_indices = @transform_3, window_bounds = array<i64: 128, 32>}]} {
    %c0 = arith.constant 0 : index
    %c0_0 = arith.constant 0 : index
    %0 = vector.load %arg1[%c0, %c0_0] : memref<128x16xf32, #tpu.memory_space<vmem>>, vector<128x16xf32>
    %c0_1 = arith.constant 0 : index
    %c0_2 = arith.constant 0 : index
    %1 = vector.load %arg2[%c0_1, %c0_2] : memref<16x32xf32, #tpu.memory_space<vmem>>, vector<16x32xf32>
    %cst = arith.constant dense<0.000000e+00> : vector<128x32xf32>
    %2 = tpu.matmul %0, %1, %cst {dimension_numbers = #tpu.dot_dimension_numbers<[1], [0], [0], [1], [0, 0, 1, 1], [], []>} : vector<128x16xf32>, vector<16x32xf32>, vector<128x32xf32> -> vector<128x32xf32>
    %c0_3 = arith.constant 0 : index
    %c0_4 = arith.constant 0 : index
    %3 = vector.load %arg3[%c0_3, %c0_4] : memref<1x32xf32, #tpu.memory_space<vmem>>, vector<1x32xf32>
    %4 = vector.broadcast %3 : vector<1x32xf32> to vector<128x32xf32>
    %5 = arith.addf %2, %4 : vector<128x32xf32>
    %6 = arith.negf %5 : vector<128x32xf32>
    %7 = math.exp %6 : vector<128x32xf32>
    %cst_5 = arith.constant 1.000000e+00 : f32
    %8 = vector.broadcast %cst_5 : f32 to vector<128x32xf32>
    %9 = arith.addf %8, %7 : vector<128x32xf32>
    %10 = arith.divf %8, %9 : vector<128x32xf32>
    %11 = arith.mulf %5, %10 : vector<128x32xf32>
    %c0_6 = arith.constant 0 : index
    %c0_7 = arith.constant 0 : index
    %12 = vector.load %arg4[%c0_6, %c0_7] : memref<128x32xf32, #tpu.memory_space<vmem>>, vector<128x32xf32>
    tpu.vector_store %arg4[%c0_6, %c0_7], %11 {strides = array<i32>} : memref<128x32xf32, #tpu.memory_space<vmem>>, vector<128x32xf32>,
    return
  }
  func.func @transform_0(%arg0: i32) -> (i32, i32) {
    %c0_i32 = arith.constant 0 : i32
    %c0_i32_0 = arith.constant 0 : i32
    return %arg0, %c0_i32 : i32, i32
  }
  func.func @transform_1(%arg0: i32) -> (i32, i32) {
    %c0_i32 = arith.constant 0 : i32
    %c0_i32_0 = arith.constant 0 : i32
    %c0_i32_1 = arith.constant 0 : i32
    return %c0_i32, %c0_i32_0 : i32, i32
  }
  func.func @transform_2(%arg0: i32) -> (i32, i32) {
    %c0_i32 = arith.constant 0 : i32
    %c0_i32_0 = arith.constant 0 : i32
    %c0_i32_1 = arith.constant 0 : i32
    return %c0_i32, %c0_i32_0 : i32, i32
  }
  func.func @transform_3(%arg0: i32) -> (i32, i32) {
    %c0_i32 = arith.constant 0 : i32
    %c0_i32_0 = arith.constant 0 : i32
    return %arg0, %c0_i32 : i32, i32
  }
}

</mosaic_0001>

<llo_original>
// kernel: tpu_custom_call.1
$region0: #{tpu_custom_call.1}
  #allocation0 [shape = 'u32[]', space=smem, size = 0x4, offset = 0x4, fixed_abs, tag = 'smem constant byte address 0x4 - core index']
  #allocation1 [shape = 'u32[144,128]{1,0:T(1,128)}', space=vmem, size = 0x12000, scoped, tag = 'internal scratch']
  %s0 = inlined_call_operand.vmem [shape: f32[128,16], index: 0, kind: input, shape index: {}]
  %s1 = inlined_call_operand.vmem [shape: f32[16,32], index: 1, kind: input, shape index: {}]
  %s2 = inlined_call_operand.vmem [shape: f32[1,32], index: 2, kind: input, shape index: {}]
  %s3 = inlined_call_operand.vmem [shape: f32[128,32], index: 3, kind: output, shape index: {}]
  %s4 = sld [smem:[#allocation0]]
  $region22: #{tpu_custom_call.1} parent=0
    _
  %s6 = ssub.s32 1, %s4
  %s7 = scalar_select 0, %s6, %s4
  // Predicated region
  $region2: #{tpu_custom_call.1} parent=0 // pred_check
    _
  $region3: #{tpu_custom_call.1} parent=0 // pred_check_branch
    %9 = sbr.rel (0) target = $region5
  $region4: #{tpu_custom_call.1} parent=0 // pred_region
    _
  $region5: #{tpu_custom_call.1} parent=0 // pred_fallthru
    _
  // Predicated region
  $region6: #{tpu_custom_call.1} parent=0 // pred_check
    _
  $region7: #{tpu_custom_call.1} parent=0 // pred_check_branch
    %11 = sbr.rel (0) target = $region9
  $region8: #{tpu_custom_call.1} parent=0 // pred_region
    _
  $region9: #{tpu_custom_call.1} parent=0 // pred_fallthru
    _
  // Predicated region
  $region10: #{tpu_custom_call.1} parent=0 // pred_check
    _
  $region11: #{tpu_custom_call.1} parent=0 // pred_check_branch
    %13 = sbr.rel (0) target = $region13
  $region12: #{tpu_custom_call.1} parent=0 // pred_region
    _
  $region13: #{tpu_custom_call.1} parent=0 // pred_fallthru
    _
  %v14 = vld [vmem:[%s0] sm:$0xff]
  %v15 = vld [vmem:[%s0 + $0x8] sm:$0xff]
  %v16 = vld [vmem:[%s0 + $0x10] sm:$0xff]
  %v17 = vld [vmem:[%s0 + $0x18] sm:$0xff]
  %v18 = vld [vmem:[%s0 + $0x20] sm:$0xff]
  %v19 = vld [vmem:[%s0 + $0x28] sm:$0xff]
  %v20 = vld [vmem:[%s0 + $0x30] sm:$0xff]
  %v21 = vld [vmem:[%s0 + $0x38] sm:$0xff]
  %v22 = vld [vmem:[%s0 + $0x40] sm:$0xff]
  %v23 = vld [vmem:[%s0 + $0x48] sm:$0xff]
  %v24 = vld [vmem:[%s0 + $0x50] sm:$0xff]
  %v25 = vld [vmem:[%s0 + $0x58] sm:$0xff]
  %v26 = vld [vmem:[%s0 + $0x60] sm:$0xff]
  %v27 = vld [vmem:[%s0 + $0x68] sm:$0xff]
  %v28 = vld [vmem:[%s0 + $0x70] sm:$0xff]
  %v29 = vld [vmem:[%s0 + $0x78] sm:$0xff]
  %v30 = vld [vmem:[%s1] sm:$0xff]
  %v31 = vld [vmem:[%s1 + $0x8] sm:$0xff]
  %v32 = vld [vmem:[%s2] sm:$0x1]
  %v34 = vlaneseq
  %v35 = vshrl.u32 %v34, 7
  %v36 = vsub.s32 0, %v35
  %v37 = vrot.slane %v32, %v36
  %vm39 = vcmask 130048
  %v41 = vsel %vm39, %v14, 0
  %v44 = vsel %vm39, %v15, 0
  %v47 = vsel %vm39, %v16, 0
  %v50 = vsel %vm39, %v17, 0
  %v53 = vsel %vm39, %v18, 0
  %v56 = vsel %vm39, %v19, 0
  %v59 = vsel %vm39, %v20, 0
  %v62 = vsel %vm39, %v21, 0
  %v65 = vsel %vm39, %v22, 0
  %v68 = vsel %vm39, %v23, 0
  %v71 = vsel %vm39, %v24, 0
  %v74 = vsel %vm39, %v25, 0
  %v77 = vsel %vm39, %v26, 0
  %v80 = vsel %vm39, %v27, 0
  %v83 = vsel %vm39, %v28, 0
  %v86 = vsel %vm39, %v29, 0
  %88 = vmatprep.subr.mxu0 0.0
  %89 = vmatpush1.msra.mxu0 %v30
  %90 = vmatprep.subr.mxu0 0.0
  %91 = vmatpush1.msra.mxu0 %v31
  %92 = vmatprep.subr.mxu0 0.0
  %93 = vmatpush1.msra.mxu0 0.0
  %94 = vmatprep.subr.mxu0 0.0
  %95 = vmatpush1.msra.mxu0 0.0
  %96 = vmatprep.subr.mxu0 0.0
  %97 = vmatpush1.msra.mxu0 0.0
  %98 = vmatprep.subr.mxu0 0.0
  %99 = vmatpush1.msra.mxu0 0.0
  %100 = vmatprep.subr.mxu0 0.0
  %101 = vmatpush1.msra.mxu0 0.0
  %102 = vmatprep.subr.mxu0 0.0
  %103 = vmatpush1.msra.mxu0 0.0
  %104 = vmatprep.subr.mxu0 0.0
  %105 = vmatpush1.msra.mxu0 0.0
  %106 = vmatprep.subr.mxu0 0.0
  %107 = vmatpush1.msra.mxu0 0.0
  %108 = vmatprep.subr.mxu0 0.0
  %109 = vmatpush1.msra.mxu0 0.0
  %110 = vmatprep.subr.mxu0 0.0
  %111 = vmatpush1.msra.mxu0 0.0
  %112 = vmatprep.subr.mxu0 0.0
  %113 = vmatpush1.msra.mxu0 0.0
  %114 = vmatprep.subr.mxu0 0.0
  %115 = vmatpush1.msra.mxu0 0.0
  %116 = vmatprep.subr.mxu0 0.0
  %117 = vmatpush1.msra.mxu0 0.0
  %118 = vmatprep.subr.mxu0 0.0
  %119 = vmatpush1.msra.mxu0 0.0
  %120 = vmatprep.subr.mxu0 0.0
  %121 = vmatpush1.msra.mxu0 0.0
  %122 = vmatprep.subr.mxu0 0.0
  %123 = vmatpush1.msra.mxu0 0.0
  %124 = vmatprep.subr.mxu0 0.0
  %125 = vmatpush1.msra.mxu0 0.0
  %126 = vmatprep.subr.mxu0 0.0
  %127 = vmatpush1.msra.mxu0 0.0
  %128 = vmatprep.subr.mxu0 0.0
  %129 = vmatpush1.msra.mxu0 0.0
  %130 = vmatprep.subr.mxu0 0.0
  %131 = vmatpush1.msra.mxu0 0.0
  %132 = vmatprep.subr.mxu0 0.0
  %133 = vmatpush1.msra.mxu0 0.0
  %134 = vmatprep.subr.mxu0 0.0
  %135 = vmatpush1.msra.mxu0 0.0
  %136 = vmatprep.subr.mxu0 0.0
  %137 = vmatpush1.msra.mxu0 0.0
  %138 = vmatprep.subr.mxu0 0.0
  %139 = vmatpush1.msra.mxu0 0.0
  %140 = vmatprep.subr.mxu0 0.0
  %141 = vmatpush1.msra.mxu0 0.0
  %142 = vmatprep.subr.mxu0 0.0
  %143 = vmatpush1.msra.mxu0 0.0
  %144 = vmatprep.subr.mxu0 0.0
  %145 = vmatpush1.msra.mxu0 0.0
  %146 = vmatprep.subr.mxu0 0.0
  %147 = vmatpush1.msra.mxu0 0.0
  %148 = vmatprep.subr.mxu0 0.0
  %149 = vmatpush1.msra.mxu0 0.0
  %150 = vmatprep.subr.mxu0 0.0
  %151 = vmatpush1.msra.mxu0 0.0
  %152 = vmatprep.mubr.f32.mxu0 0.0
  %153 = vmatmul.mubr.f32.gmra.mrb[0].mxu0 %v41
  %v154 = vpop.f32.mrb[0].mxu0
  %v155 = vadd.f32 %v37, %v154
  %v156 = vpop.f32.mrb[0].mxu0
  %157 = vmatprep.mubr.f32.mxu0 0.0
  %158 = vmatmul.mubr.f32.gmra.mrb[0].mxu0 %v44
  %v159 = vpop.f32.mrb[0].mxu0
  %v160 = vadd.f32 %v37, %v159
  %v161 = vpop.f32.mrb[0].mxu0
  %162 = vmatprep.mubr.f32.mxu0 0.0
  %163 = vmatmul.mubr.f32.gmra.mrb[0].mxu0 %v47
  %v164 = vpop.f32.mrb[0].mxu0
  %v165 = vadd.f32 %v37, %v164
  %v166 = vpop.f32.mrb[0].mxu0
  %167 = vmatprep.mubr.f32.mxu0 0.0
  %168 = vmatmul.mubr.f32.gmra.mrb[0].mxu0 %v50
  %v169 = vpop.f32.mrb[0].mxu0
  %v170 = vadd.f32 %v37, %v169
  %v171 = vpop.f32.mrb[0].mxu0
  %172 = vmatprep.mubr.f32.mxu0 0.0
  %173 = vmatmul.mubr.f32.gmra.mrb[0].mxu0 %v53
  %v174 = vpop.f32.mrb[0].mxu0
  %v175 = vadd.f32 %v37, %v174
  %v176 = vpop.f32.mrb[0].mxu0
  %177 = vmatprep.mubr.f32.mxu0 0.0
  %178 = vmatmul.mubr.f32.gmra.mrb[0].mxu0 %v56
  %v179 = vpop.f32.mrb[0].mxu0
  %v180 = vadd.f32 %v37, %v179
  %v181 = vpop.f32.mrb[0].mxu0
  %182 = vmatprep.mubr.f32.mxu0 0.0
  %183 = vmatmul.mubr.f32.gmra.mrb[0].mxu0 %v59
  %v184 = vpop.f32.mrb[0].mxu0
  %v185 = vadd.f32 %v37, %v184
  %v186 = vpop.f32.mrb[0].mxu0
  %187 = vmatprep.mubr.f32.mxu0 0.0
  %188 = vmatmul.mubr.f32.gmra.mrb[0].mxu0 %v62
  %v189 = vpop.f32.mrb[0].mxu0
  %v190 = vadd.f32 %v37, %v189
  %v191 = vpop.f32.mrb[0].mxu0
  %192 = vmatprep.mubr.f32.mxu0 0.0
  %193 = vmatmul.mubr.f32.gmra.mrb[0].mxu0 %v65
  %v194 = vpop.f32.mrb[0].mxu0
  %v195 = vadd.f32 %v37, %v194
  %v196 = vpop.f32.mrb[0].mxu0
  %197 = vmatprep.mubr.f32.mxu0 0.0
  %198 = vmatmul.mubr.f32.gmra.mrb[0].mxu0 %v68
  %v199 = vpop.f32.mrb[0].mxu0
  %v200 = vadd.f32 %v37, %v199
  %v201 = vpop.f32.mrb[0].mxu0
  %202 = vmatprep.mubr.f32.mxu0 0.0
  %203 = vmatmul.mubr.f32.gmra.mrb[0].mxu0 %v71
  %v204 = vpop.f32.mrb[0].mxu0
  %v205 = vadd.f32 %v37, %v204
  %v206 = vpop.f32.mrb[0].mxu0
  %207 = vmatprep.mubr.f32.mxu0 0.0
  %208 = vmatmul.mubr.f32.gmra.mrb[0].mxu0 %v74
  %v209 = vpop.f32.mrb[0].mxu0
  %v210 = vadd.f32 %v37, %v209
  %v211 = vpop.f32.mrb[0].mxu0
  %212 = vmatprep.mubr.f32.mxu0 0.0
  %213 = vmatmul.mubr.f32.gmra.mrb[0].mxu0 %v77
  %v214 = vpop.f32.mrb[0].mxu0
  %v215 = vadd.f32 %v37, %v214
  %v216 = vpop.f32.mrb[0].mxu0
  %217 = vmatprep.mubr.f32.mxu0 0.0
  %218 = vmatmul.mubr.f32.gmra.mrb[0].mxu0 %v80
  %v219 = vpop.f32.mrb[0].mxu0
  %v220 = vadd.f32 %v37, %v219
  %v221 = vpop.f32.mrb[0].mxu0
  %222 = vmatprep.mubr.f32.mxu0 0.0
  %223 = vmatmul.mubr.f32.gmra.mrb[0].mxu0 %v83
  %v224 = vpop.f32.mrb[0].mxu0
  %v225 = vadd.f32 %v37, %v224
  %v226 = vpop.f32.mrb[0].mxu0
  %227 = vmatprep.mubr.f32.mxu0 0.0
  %228 = vmatmul.mubr.f32.gmra.mrb[0].mxu0 %v86
  %v229 = vpop.f32.mrb[0].mxu0
  %v230 = vadd.f32 %v37, %v229
  %v231 = vpop.f32.mrb[0].mxu0
  %232 = vdwg.mxu0
  %v233 = vxor.u32 %v155, 2147483648
  %v234 = vxor.u32 %v160, 2147483648
  %v235 = vxor.u32 %v165, 2147483648
  %v236 = vxor.u32 %v170, 2147483648
  %v237 = vxor.u32 %v175, 2147483648
  %v238 = vxor.u32 %v180, 2147483648
  %v239 = vxor.u32 %v185, 2147483648
  %v240 = vxor.u32 %v190, 2147483648
  %v241 = vxor.u32 %v195, 2147483648
  %v242 = vxor.u32 %v200, 2147483648
  %v243 = vxor.u32 %v205, 2147483648
  %v244 = vxor.u32 %v210, 2147483648
  %v245 = vxor.u32 %v215, 2147483648
  %v246 = vxor.u32 %v220, 2147483648
  %v247 = vxor.u32 %v225, 2147483648
  %v248 = vxor.u32 %v230, 2147483648
  %v249 = vmul.f32 %v233, 1.442695
  %v250 = vpow.pop %v249
  %v251 = vmul.f32 %v234, 1.442695
  %v252 = vpow.pop %v251
  %v253 = vmul.f32 %v235, 1.442695
  %v254 = vpow.pop %v253
  %v255 = vmul.f32 %v236, 1.442695
  %v256 = vpow.pop %v255
  %v257 = vmul.f32 %v237, 1.442695
  %v258 = vpow.pop %v257
  %v259 = vmul.f32 %v238, 1.442695
  %v260 = vpow.pop %v259
  %v261 = vmul.f32 %v239, 1.442695
  %v262 = vpow.pop %v261
  %v263 = vmul.f32 %v240, 1.442695
  %v264 = vpow.pop %v263
  %v265 = vmul.f32 %v241, 1.442695
  %v266 = vpow.pop %v265
  %v267 = vmul.f32 %v242, 1.442695
  %v268 = vpow.pop %v267
  %v269 = vmul.f32 %v243, 1.442695
  %v270 = vpow.pop %v269
  %v271 = vmul.f32 %v244, 1.442695
  %v272 = vpow.pop %v271
  %v273 = vmul.f32 %v245, 1.442695
  %v274 = vpow.pop %v273
  %v275 = vmul.f32 %v246, 1.442695
  %v276 = vpow.pop %v275
  %v277 = vmul.f32 %v247, 1.442695
  %v278 = vpow.pop %v277
  %v279 = vmul.f32 %v248, 1.442695
  %v280 = vpow.pop %v279
  %v281 = vadd.f32 %v250, 1.0
  %v282 = vadd.f32 %v252, 1.0
  %v283 = vadd.f32 %v254, 1.0
  %v284 = vadd.f32 %v256, 1.0
  %v285 = vadd.f32 %v258, 1.0
  %v286 = vadd.f32 %v260, 1.0
  %v287 = vadd.f32 %v262, 1.0
  %v288 = vadd.f32 %v264, 1.0
  %v289 = vadd.f32 %v266, 1.0
  %v290 = vadd.f32 %v268, 1.0
  %v291 = vadd.f32 %v270, 1.0
  %v292 = vadd.f32 %v272, 1.0
  %v293 = vadd.f32 %v274, 1.0
  %v294 = vadd.f32 %v276, 1.0
  %v295 = vadd.f32 %v278, 1.0
  %v296 = vadd.f32 %v280, 1.0
  %v297 = vrcp.pop %v281
  %v298 = vmul.f32 1.0, %v297
  %v299 = vrcp.pop %v282
  %v300 = vmul.f32 1.0, %v299
  %v301 = vrcp.pop %v283
  %v302 = vmul.f32 1.0, %v301
  %v303 = vrcp.pop %v284
  %v304 = vmul.f32 1.0, %v303
  %v305 = vrcp.pop %v285
  %v306 = vmul.f32 1.0, %v305
  %v307 = vrcp.pop %v286
  %v308 = vmul.f32 1.0, %v307
  %v309 = vrcp.pop %v287
  %v310 = vmul.f32 1.0, %v309
  %v311 = vrcp.pop %v288
  %v312 = vmul.f32 1.0, %v311
  %v313 = vrcp.pop %v289
  %v314 = vmul.f32 1.0, %v313
  %v315 = vrcp.pop %v290
  %v316 = vmul.f32 1.0, %v315
  %v317 = vrcp.pop %v291
  %v318 = vmul.f32 1.0, %v317
  %v319 = vrcp.pop %v292
  %v320 = vmul.f32 1.0, %v319
  %v321 = vrcp.pop %v293
  %v322 = vmul.f32 1.0, %v321
  %v323 = vrcp.pop %v294
  %v324 = vmul.f32 1.0, %v323
  %v325 = vrcp.pop %v295
  %v326 = vmul.f32 1.0, %v325
  %v327 = vrcp.pop %v296
  %v328 = vmul.f32 1.0, %v327
  %v329 = vmul.f32 %v155, %v298
  %v330 = vmul.f32 %v160, %v300
  %v331 = vmul.f32 %v165, %v302
  %v332 = vmul.f32 %v170, %v304
  %v333 = vmul.f32 %v175, %v306
  %v334 = vmul.f32 %v180, %v308
  %v335 = vmul.f32 %v185, %v310
  %v336 = vmul.f32 %v190, %v312
  %v337 = vmul.f32 %v195, %v314
  %v338 = vmul.f32 %v200, %v316
  %v339 = vmul.f32 %v205, %v318
  %v340 = vmul.f32 %v210, %v320
  %v341 = vmul.f32 %v215, %v322
  %v342 = vmul.f32 %v220, %v324
  %v343 = vmul.f32 %v225, %v326
  %v344 = vmul.f32 %v230, %v328
  %vm345 = vcmask 261120
  %346 = vst.msk [vmem:[%s3] sm:$0xff] %vm345, %v329
  %347 = vst.msk [vmem:[%s3 + $0x8] sm:$0xff] %vm345, %v330
  %348 = vst.msk [vmem:[%s3 + $0x10] sm:$0xff] %vm345, %v331
  %349 = vst.msk [vmem:[%s3 + $0x18] sm:$0xff] %vm345, %v332
  %350 = vst.msk [vmem:[%s3 + $0x20] sm:$0xff] %vm345, %v333
  %351 = vst.msk [vmem:[%s3 + $0x28] sm:$0xff] %vm345, %v334
  %352 = vst.msk [vmem:[%s3 + $0x30] sm:$0xff] %vm345, %v335
  %353 = vst.msk [vmem:[%s3 + $0x38] sm:$0xff] %vm345, %v336
  %354 = vst.msk [vmem:[%s3 + $0x40] sm:$0xff] %vm345, %v337
  %355 = vst.msk [vmem:[%s3 + $0x48] sm:$0xff] %vm345, %v338
  %356 = vst.msk [vmem:[%s3 + $0x50] sm:$0xff] %vm345, %v339
  %357 = vst.msk [vmem:[%s3 + $0x58] sm:$0xff] %vm345, %v340
  %358 = vst.msk [vmem:[%s3 + $0x60] sm:$0xff] %vm345, %v341
  %359 = vst.msk [vmem:[%s3 + $0x68] sm:$0xff] %vm345, %v342
  %360 = vst.msk [vmem:[%s3 + $0x70] sm:$0xff] %vm345, %v343
  %361 = vst.msk [vmem:[%s3 + $0x78] sm:$0xff] %vm345, %v344
  // Predicated region
  $region14: #{tpu_custom_call.1} parent=0 // pred_check
    _
  $region15: #{tpu_custom_call.1} parent=0 // pred_check_branch
    %363 = sbr.rel (0) target = $region17
  $region16: #{tpu_custom_call.1} parent=0 // pred_region
    _
  $region17: #{tpu_custom_call.1} parent=0 // pred_fallthru
    _
  // Predicated region
  $region18: #{tpu_custom_call.1} parent=0 // pred_check
    _
  $region19: #{tpu_custom_call.1} parent=0 // pred_check_branch
    %365 = sbr.rel (0) target = $region21
  $region20: #{tpu_custom_call.1} parent=0 // pred_region
    _
  $region21: #{tpu_custom_call.1} parent=0 // pred_fallthru
    _

</llo_original>
